<compile_context>
chip_gen: v7x
topology: tpu7x:2x2x1
jax: 0.10.0
libtpu: 0.0.40
codegen_flags: <defaults>
</compile_context>

<pallas_src>
import functools

import jax
import jax.numpy as jnp
from jax.experimental import pallas as pl
from jax.experimental.pallas import tpu as pltpu


# ---------------------------------------------------------------------------
# xconfig (synthetic, small)
# ---------------------------------------------------------------------------
ENCODER_DIM = 16       # xconfig.encoder_dim
ATT_DIM = 32           # xconfig.decoder_att_dim
STATE_DIM = 32         # xconfig.decoder_state_dim
EMBED_DIM = 16         # xconfig.decoder_embed_dim
ANGLE_EMBED_DIM = 8    # xconfig.decoder_angle_embed_dim (unused in forward)


# ---------------------------------------------------------------------------
# Pallas kernel: whole problem in one block, batch folded into the lane dim.
#   - 1x1 conv (attention_conv)          -> single lane-dense MXU matmul
#   - masked spatial mean (fir_crx_info) -> VPU multiply + XLU lane reduces
#   - transition_gru_state_init (Linear) -> tiny MXU matmul + bias
# ---------------------------------------------------------------------------
def predecoder_kernel(x_ref, m_ref, wc_ref, wl_ref, bl_ref,
                      proj_ref, state_ref, crx_ref, *, B, HW):
    # x_ref:  (C, B*HW)  encode, channels on sublanes, batch*spatial on lanes
    # m_ref:  (1, B*HW)  spatial mask, same lane layout
    # wc_ref: (A, C)     1x1 conv weight, PyTorch (out, in) layout
    # wl_ref: (S, C)     linear weight,  PyTorch (out, in) layout
    # bl_ref: (S, 1)     linear bias (column)
    x = x_ref[...]
    m = m_ref[...]

    # encoded_proj = attention_conv(encode):
    # one MXU matmul, lane-dense (B*HW-wide) unmasked store.
    proj_ref[...] = jnp.dot(
        wc_ref[...], x,
        preferred_element_type=jnp.float32,
        precision=jax.lax.Precision.HIGHEST,
    ).astype(proj_ref.dtype)

    # fir_crx_info = (encode * mask).sum(spatial) / mask.sum(spatial)
    # VPU multiply, then one XLU lane reduce per batch segment of the lane axis.
    # (B is tiny here; for larger B fold it into a "parallel" grid axis instead
    # of growing this static loop.)
    xm = x * m                                                  # (C, B*HW) VPU
    s_cols, n_cols = [], []
    for b in range(B):
        sl = slice(b * HW, (b + 1) * HW)                        # static slice
        s_cols.append(jnp.sum(xm[:, sl], axis=1, keepdims=True))   # (C, 1)
        n_cols.append(jnp.sum(m[:, sl], axis=1, keepdims=True))    # (1, 1)
    s_t = jnp.concatenate(s_cols, axis=1)                       # (C, B)
    n_t = jnp.concatenate(n_cols, axis=1)                       # (1, B)
    # NOTE: an all-zero mask gives inf/nan here, matching the PyTorch math.
    # Exact divide (VALU).  pl.reciprocal(approx=True) -> EUP if tolerable.
    crx_t = s_t / n_t                                           # (C, B)
    crx_ref[...] = crx_t.astype(crx_ref.dtype)

    # initial_state = Linear(fir_crx_info): (S,C) @ (C,B) + (S,1) -> (S,B)
    st_t = jnp.dot(
        wl_ref[...], crx_t,
        preferred_element_type=jnp.float32,
        precision=jax.lax.Precision.HIGHEST,
    ) + bl_ref[...]
    state_ref[...] = st_t.astype(state_ref.dtype)


@functools.partial(jax.jit, static_argnames=("mem_length",))
def predecoder_forward(encode, encode_mask, w_conv, w_lin, b_lin, mem_length=1):
    """encode: (B, C_enc, H, W) NCHW, encode_mask: (B, 1, H, W)."""
    B, C, H, W = encode.shape
    HW = H * W
    A = w_conv.shape[0]        # att_dim
    S = w_lin.shape[0]         # state_dim

    # Fold batch into the lane dim: (B,C,HW) -> (C, B*HW).  Tiny XLA transpose
    # (8 KB at these shapes); mask is already channel-1 so it reshapes for free.
    x = encode.reshape(B, C, HW).transpose(1, 0, 2).reshape(C, B * HW)
    m = encode_mask.reshape(1, B * HW)
    wc = w_conv.reshape(A, C)            # 1x1 conv kernel -> (out, in)
    bl = b_lin.reshape(S, 1)

    flops = 2 * A * C * B * HW + 2 * B * C * HW + 2 * S * C * B
    bytes_accessed = 4 * (C * B * HW + B * HW + A * C + S * C + S
                          + A * B * HW + C * B + S * B)

    vmem = pltpu.MemorySpace.VMEM
    proj_flat, state_t, crx_t = pl.pallas_call(
        functools.partial(predecoder_kernel, B=B, HW=HW),
        out_shape=(
            jax.ShapeDtypeStruct((A, B * HW), jnp.float32),
            jax.ShapeDtypeStruct((S, B), jnp.float32),
            jax.ShapeDtypeStruct((C, B), jnp.float32),
        ),
        in_specs=[pl.BlockSpec(memory_space=vmem)] * 5,
        out_specs=(
            pl.BlockSpec(memory_space=vmem),
            pl.BlockSpec(memory_space=vmem),
            pl.BlockSpec(memory_space=vmem),
        ),
        cost_estimate=pl.CostEstimate(
            flops=flops, transcendentals=0, bytes_accessed=bytes_accessed),
    )(x, m, wc, w_lin, bl)

    # Big output back to NCHW (small XLA transpose); tiny state/crx transposes.
    encoded_proj = proj_flat.reshape(A, B, HW).transpose(1, 0, 2).reshape(B, A, H, W)
    enc_init_states = [state_t.T, crx_t.T]

    # zero_init_states: pure zeros construction (no hot-path compute) -> plain JAX
    attention_weight_init = jnp.zeros((B, 1, H, W), jnp.float32)
    attention_cum_weight_init = jnp.zeros((B, 1, H, W), jnp.float32)
    readout_embed_init = jnp.zeros((B, EMBED_DIM), jnp.float32)
    memory_init = jnp.zeros((B, mem_length, EMBED_DIM + STATE_DIM + ENCODER_DIM),
                            jnp.float32)
    memory_init_mask = jnp.zeros((B, mem_length), jnp.float32).at[:, 0].set(1.0)
    memory_weight = jnp.zeros((B, mem_length, 2, H, W), jnp.float32)
    zero_init_states = [attention_weight_init, attention_cum_weight_init,
                        readout_embed_init, memory_init, memory_init_mask,
                        memory_weight]

    return encoded_proj, enc_init_states, zero_init_states


if __name__ == "__main__":
    key = jax.random.PRNGKey(0)
    k1, k2, k3, k4, k5 = jax.random.split(key, 5)

    B, H, W = 2, 8, 8
    # deterministic synthetic parameters (shapes match nn.Conv2d / nn.Linear)
    w_conv = jax.random.normal(k1, (ATT_DIM, ENCODER_DIM, 1, 1), jnp.float32) * 0.1
    w_lin = jax.random.normal(k2, (STATE_DIM, ENCODER_DIM), jnp.float32) * 0.1
    b_lin = jax.random.normal(k3, (STATE_DIM,), jnp.float32) * 0.1

    # inputs (NCHW, like the PyTorch module)
    encode = jax.random.normal(k4, (B, ENCODER_DIM, H, W), jnp.float32)
    encode_mask = (jax.random.uniform(k5, (B, 1, H, W)) > 0.3).astype(jnp.float32)
    # guarantee non-empty masks
    encode_mask = encode_mask.at[:, :, 0, 0].set(1.0)

    encoded_proj, enc_init_states, zero_init_states = jax.block_until_ready(
        predecoder_forward(encode, encode_mask, w_conv, w_lin, b_lin))

    # correctness check vs plain-JAX reference of the PyTorch forward
    ref_proj = jnp.einsum("bchw,oc->bohw", encode,
                          w_conv.reshape(ATT_DIM, ENCODER_DIM),
                          precision="highest")
    masked = encode * encode_mask
    ref_crx = masked.sum(axis=(2, 3)) / encode_mask.sum(axis=(2, 3))
    ref_state = jnp.einsum("bc,sc->bs", ref_crx, w_lin,
                           precision="highest") + b_lin

    assert encoded_proj.shape == (B, ATT_DIM, H, W)
    assert jnp.allclose(encoded_proj, ref_proj, atol=1e-4, rtol=1e-4)
    assert jnp.allclose(enc_init_states[1], ref_crx, atol=1e-5, rtol=1e-5)
    assert jnp.allclose(enc_init_states[0], ref_state, atol=1e-4, rtol=1e-4)
    assert zero_init_states[4][0, 0] == 1.0
    assert zero_init_states[3].shape == (B, 1, EMBED_DIM + STATE_DIM + ENCODER_DIM)

    print("KERNEL_OK")
</pallas_src>

<mosaic_0001>
module attributes {stable_mosaic.version = 11 : i64} {
  func.func @predecoder_kernel(%arg0: memref<16x128xf32, #tpu.memory_space<vmem>>, %arg1: memref<1x128xf32, #tpu.memory_space<vmem>>, %arg2: memref<32x16xf32, #tpu.memory_space<vmem>>, %arg3: memref<32x16xf32, #tpu.memory_space<vmem>>, %arg4: memref<32x1xf32, #tpu.memory_space<vmem>>, %arg5: memref<32x128xf32, #tpu.memory_space<vmem>>, %arg6: memref<32x2xf32, #tpu.memory_space<vmem>>, %arg7: memref<16x2xf32, #tpu.memory_space<vmem>>) attributes {dimension_semantics = [], scalar_prefetch = 0 : i64, scratch_operands = 0 : i64, tpu.core_type = #tpu.core_type<tc>} {
    %c0 = arith.constant 0 : index
    %c0_0 = arith.constant 0 : index
    %0 = vector.load %arg0[%c0, %c0_0] : memref<16x128xf32, #tpu.memory_space<vmem>>, vector<16x128xf32>
    %c0_1 = arith.constant 0 : index
    %c0_2 = arith.constant 0 : index
    %1 = vector.load %arg1[%c0_1, %c0_2] : memref<1x128xf32, #tpu.memory_space<vmem>>, vector<1x128xf32>
    %c0_3 = arith.constant 0 : index
    %c0_4 = arith.constant 0 : index
    %2 = vector.load %arg2[%c0_3, %c0_4] : memref<32x16xf32, #tpu.memory_space<vmem>>, vector<32x16xf32>
    %cst = arith.constant dense<0.000000e+00> : vector<32x128xf32>
    %3 = tpu.matmul %2, %0, %cst {dimension_numbers = #tpu.dot_dimension_numbers<[1], [0], [0], [1], [0, 0, 1, 1], [], []>, precision = #tpu.contract_precision<fp32>} : vector<32x16xf32>, vector<16x128xf32>, vector<32x128xf32> -> vector<32x128xf32>
    %c0_5 = arith.constant 0 : index
    %c0_6 = arith.constant 0 : index
    %4 = vector.load %arg5[%c0_5, %c0_6] : memref<32x128xf32, #tpu.memory_space<vmem>>, vector<32x128xf32>
    tpu.vector_store %arg5[%c0_5, %c0_6], %3 {strides = array<i32>} : memref<32x128xf32, #tpu.memory_space<vmem>>, vector<32x128xf32>,
    %5 = vector.broadcast %1 : vector<1x128xf32> to vector<16x128xf32>
    %6 = arith.mulf %0, %5 : vector<16x128xf32>
    %7 = vector.extract_strided_slice %6 {offsets = [0, 0], sizes = [16, 64], strides = [1, 1]} : vector<16x128xf32> to vector<16x64xf32>
    %cst_7 = arith.constant dense<0.000000e+00> : vector<16xf32>
    %8 = vector.multi_reduction <add>, %7, %cst_7 [1] : vector<16x64xf32> to vector<16xf32>
    %9 = vector.shape_cast %8 : vector<16xf32> to vector<16x1xf32>
    %10 = vector.extract_strided_slice %1 {offsets = [0, 0], sizes = [1, 64], strides = [1, 1]} : vector<1x128xf32> to vector<1x64xf32>
    %cst_8 = arith.constant dense<0.000000e+00> : vector<1xf32>
    %11 = vector.multi_reduction <add>, %10, %cst_8 [1] : vector<1x64xf32> to vector<1xf32>
    %12 = vector.shape_cast %11 : vector<1xf32> to vector<1x1xf32>
    %13 = vector.extract_strided_slice %6 {offsets = [0, 64], sizes = [16, 64], strides = [1, 1]} : vector<16x128xf32> to vector<16x64xf32>
    %cst_9 = arith.constant dense<0.000000e+00> : vector<16xf32>
    %14 = vector.multi_reduction <add>, %13, %cst_9 [1] : vector<16x64xf32> to vector<16xf32>
    %15 = vector.shape_cast %14 : vector<16xf32> to vector<16x1xf32>
    %16 = vector.extract_strided_slice %1 {offsets = [0, 64], sizes = [1, 64], strides = [1, 1]} : vector<1x128xf32> to vector<1x64xf32>
    %cst_10 = arith.constant dense<0.000000e+00> : vector<1xf32>
    %17 = vector.multi_reduction <add>, %16, %cst_10 [1] : vector<1x64xf32> to vector<1xf32>
    %18 = vector.shape_cast %17 : vector<1xf32> to vector<1x1xf32>
    %19 = tpu.concatenate %9, %15 in 1 : vector<16x1xf32>, vector<16x1xf32> -> vector<16x2xf32>
    %20 = tpu.concatenate %12, %18 in 1 : vector<1x1xf32>, vector<1x1xf32> -> vector<1x2xf32>
    %21 = vector.broadcast %20 : vector<1x2xf32> to vector<16x2xf32>
    %22 = arith.divf %19, %21 : vector<16x2xf32>
    %c0_11 = arith.constant 0 : index
    %c0_12 = arith.constant 0 : index
    %23 = vector.load %arg7[%c0_11, %c0_12] : memref<16x2xf32, #tpu.memory_space<vmem>>, vector<16x2xf32>
    tpu.vector_store %arg7[%c0_11, %c0_12], %22 {strides = array<i32>} : memref<16x2xf32, #tpu.memory_space<vmem>>, vector<16x2xf32>,
    %c0_13 = arith.constant 0 : index
    %c0_14 = arith.constant 0 : index
    %24 = vector.load %arg3[%c0_13, %c0_14] : memref<32x16xf32, #tpu.memory_space<vmem>>, vector<32x16xf32>
    %cst_15 = arith.constant dense<0.000000e+00> : vector<32x2xf32>
    %25 = tpu.matmul %24, %22, %cst_15 {dimension_numbers = #tpu.dot_dimension_numbers<[1], [0], [0], [1], [0, 0, 1, 1], [], []>, precision = #tpu.contract_precision<fp32>} : vector<32x16xf32>, vector<16x2xf32>, vector<32x2xf32> -> vector<32x2xf32>
    %c0_16 = arith.constant 0 : index
    %c0_17 = arith.constant 0 : index
    %26 = vector.load %arg4[%c0_16, %c0_17] : memref<32x1xf32, #tpu.memory_space<vmem>>, vector<32x1xf32>
    %27 = vector.broadcast %26 : vector<32x1xf32> to vector<32x2xf32>
    %28 = arith.addf %25, %27 : vector<32x2xf32>
    %c0_18 = arith.constant 0 : index
    %c0_19 = arith.constant 0 : index
    %29 = vector.load %arg6[%c0_18, %c0_19] : memref<32x2xf32, #tpu.memory_space<vmem>>, vector<32x2xf32>
    tpu.vector_store %arg6[%c0_18, %c0_19], %28 {strides = array<i32>} : memref<32x2xf32, #tpu.memory_space<vmem>>, vector<32x2xf32>,
    return
  }
}

</mosaic_0001>

<llo_original>
// kernel: predecoder_forward.1
$region0: #{predecoder_forward.1}
  #allocation0 [shape = 'u32[]', space=smem, size = 0x4, offset = 0x4, fixed_abs, tag = 'smem constant byte address 0x4 - core index']
  #allocation1 [shape = 'u32[144,128]{1,0:T(1,128)}', space=vmem, size = 0x12000, scoped, tag = 'internal scratch']
  %s0 = inlined_call_operand.vmem [shape: f32[16,128], index: 0, kind: input, shape index: {}]
  %s1 = inlined_call_operand.vmem [shape: f32[1,128], index: 1, kind: input, shape index: {}]
  %s2 = inlined_call_operand.vmem [shape: f32[32,16], index: 2, kind: input, shape index: {}]
  %s3 = inlined_call_operand.vmem [shape: f32[32,16], index: 3, kind: input, shape index: {}]
  %s4 = inlined_call_operand.vmem [shape: f32[32,1], index: 4, kind: input, shape index: {}]
  %s5 = inlined_call_operand.vmem [shape: f32[32,128], index: 5, kind: output, shape index: {0}]
  %s6 = inlined_call_operand.vmem [shape: f32[32,2], index: 6, kind: output, shape index: {1}]
  %s7 = inlined_call_operand.vmem [shape: f32[16,2], index: 7, kind: output, shape index: {2}]
  %8 = xla_tuple %s5, %s6, %s7
  %s9 = sld [smem:[#allocation0]]
  $region46: #{predecoder_forward.1} parent=0
    _
  %s11 = ssub.s32 1, %s9
  %s12 = scalar_select 0, %s11, %s9
  // Predicated region
  $region2: #{predecoder_forward.1} parent=0 // pred_check
    _
  $region3: #{predecoder_forward.1} parent=0 // pred_check_branch
    %14 = sbr.rel (0) target = $region5
  $region4: #{predecoder_forward.1} parent=0 // pred_region
    _
  $region5: #{predecoder_forward.1} parent=0 // pred_fallthru
    _
  // Predicated region
  $region6: #{predecoder_forward.1} parent=0 // pred_check
    _
  $region7: #{predecoder_forward.1} parent=0 // pred_check_branch
    %16 = sbr.rel (0) target = $region9
  $region8: #{predecoder_forward.1} parent=0 // pred_region
    _
  $region9: #{predecoder_forward.1} parent=0 // pred_fallthru
    _
  // Predicated region
  $region10: #{predecoder_forward.1} parent=0 // pred_check
    _
  $region11: #{predecoder_forward.1} parent=0 // pred_check_branch
    %18 = sbr.rel (0) target = $region13
  $region12: #{predecoder_forward.1} parent=0 // pred_region
    _
  $region13: #{predecoder_forward.1} parent=0 // pred_fallthru
    _
  // Predicated region
  $region14: #{predecoder_forward.1} parent=0 // pred_check
    _
  $region15: #{predecoder_forward.1} parent=0 // pred_check_branch
    %20 = sbr.rel (0) target = $region17
  $region16: #{predecoder_forward.1} parent=0 // pred_region
    _
  $region17: #{predecoder_forward.1} parent=0 // pred_fallthru
    _
  // Predicated region
  $region18: #{predecoder_forward.1} parent=0 // pred_check
    _
  $region19: #{predecoder_forward.1} parent=0 // pred_check_branch
    %22 = sbr.rel (0) target = $region21
  $region20: #{predecoder_forward.1} parent=0 // pred_region
    _
  $region21: #{predecoder_forward.1} parent=0 // pred_fallthru
    _
  %v23 = vld [vmem:[%s0] sm:$0xff]
  %v24 = vld [vmem:[%s0 + $0x8] sm:$0xff]
  %v25 = vld [vmem:[%s1] sm:$0x1]
  %v26 = vld [vmem:[%s2] sm:$0xff]
  %v27 = vld [vmem:[%s2 + $0x8] sm:$0xff]
  %v28 = vld [vmem:[%s2 + $0x10] sm:$0xff]
  %v29 = vld [vmem:[%s2 + $0x18] sm:$0xff]
  %vm30 = vcmask 130048
  %v32 = vsel %vm30, %v26, 0
  %v35 = vsel %vm30, %v27, 0
  %v38 = vsel %vm30, %v28, 0
  %v41 = vsel %vm30, %v29, 0
  %43 = vmatprep.subr.mxu0 0.0
  %v44 = vand.u32 %v23, 4294901760
  %45 = vmatpush1.msra.mxu0 %v44
  %46 = vmatprep.subr.mxu0 0.0
  %v47 = vand.u32 %v24, 4294901760
  %48 = vmatpush1.msra.mxu0 %v47
  %49 = vmatprep.subr.mxu0 0.0
  %50 = vmatpush1.msra.mxu0 0.0
  %51 = vmatprep.subr.mxu0 0.0
  %52 = vmatpush1.msra.mxu0 0.0
  %53 = vmatprep.subr.mxu0 0.0
  %54 = vmatpush1.msra.mxu0 0.0
  %55 = vmatprep.subr.mxu0 0.0
  %56 = vmatpush1.msra.mxu0 0.0
  %57 = vmatprep.subr.mxu0 0.0
  %58 = vmatpush1.msra.mxu0 0.0
  %59 = vmatprep.subr.mxu0 0.0
  %60 = vmatpush1.msra.mxu0 0.0
  %61 = vmatprep.subr.mxu0 0.0
  %62 = vmatpush1.msra.mxu0 0.0
  %63 = vmatprep.subr.mxu0 0.0
  %64 = vmatpush1.msra.mxu0 0.0
  %65 = vmatprep.subr.mxu0 0.0
  %66 = vmatpush1.msra.mxu0 0.0
  %67 = vmatprep.subr.mxu0 0.0
  %68 = vmatpush1.msra.mxu0 0.0
  %69 = vmatprep.subr.mxu0 0.0
  %70 = vmatpush1.msra.mxu0 0.0
  %71 = vmatprep.subr.mxu0 0.0
  %72 = vmatpush1.msra.mxu0 0.0
  %73 = vmatprep.subr.mxu0 0.0
  %74 = vmatpush1.msra.mxu0 0.0
  %75 = vmatprep.subr.mxu0 0.0
  %76 = vmatpush1.msra.mxu0 0.0
  %77 = vmatprep.subr.mxu0 0.0
  %78 = vmatpush1.msra.mxu0 0.0
  %79 = vmatprep.subr.mxu0 0.0
  %80 = vmatpush1.msra.mxu0 0.0
  %81 = vmatprep.subr.mxu0 0.0
  %82 = vmatpush1.msra.mxu0 0.0
  %83 = vmatprep.subr.mxu0 0.0
  %84 = vmatpush1.msra.mxu0 0.0
  %85 = vmatprep.subr.mxu0 0.0
  %86 = vmatpush1.msra.mxu0 0.0
  %87 = vmatprep.subr.mxu0 0.0
  %88 = vmatpush1.msra.mxu0 0.0
  %89 = vmatprep.subr.mxu0 0.0
  %90 = vmatpush1.msra.mxu0 0.0
  %91 = vmatprep.subr.mxu0 0.0
  %92 = vmatpush1.msra.mxu0 0.0
  %93 = vmatprep.subr.mxu0 0.0
  %94 = vmatpush1.msra.mxu0 0.0
  %95 = vmatprep.subr.mxu0 0.0
  %96 = vmatpush1.msra.mxu0 0.0
  %97 = vmatprep.subr.mxu0 0.0
  %98 = vmatpush1.msra.mxu0 0.0
  %99 = vmatprep.subr.mxu0 0.0
  %100 = vmatpush1.msra.mxu0 0.0
  %101 = vmatprep.subr.mxu0 0.0
  %102 = vmatpush1.msra.mxu0 0.0
  %103 = vmatprep.subr.mxu0 0.0
  %104 = vmatpush1.msra.mxu0 0.0
  %105 = vmatprep.subr.mxu0 0.0
  %106 = vmatpush1.msra.mxu0 0.0
  %107 = vmatprep.subr.mxu0 0.0
  %108 = vmatpush1.msra.mxu0 0.0
  %109 = vmatprep.mubr.f32.mxu0 0.0
  %v110 = vand.u32 %v32, 4294901760
  %v111 = vsub.f32 %v32, %v110
  %v112 = vand.u32 %v111, 4294901760
  %v113 = vsub.f32 %v111, %v112
  %v114 = vand.u32 %v113, 4294901760
  %115 = vmatmul.mubr.f32.gmra.mrb[0].mxu0 %v114
  %v116 = vpop.f32.mrb[0].mxu0
  %v117 = vadd.f32 0.0, %v116
  %v118 = vpop.f32.mrb[0].mxu0
  %119 = vmatprep.mubr.f32.mxu0 0.0
  %v120 = vand.u32 %v35, 4294901760
  %v121 = vsub.f32 %v35, %v120
  %v122 = vand.u32 %v121, 4294901760
  %v123 = vsub.f32 %v121, %v122
  %v124 = vand.u32 %v123, 4294901760
  %125 = vmatmul.mubr.f32.gmra.mrb[0].mxu0 %v124
  %v126 = vpop.f32.mrb[0].mxu0
  %v127 = vadd.f32 0.0, %v126
  %v128 = vpop.f32.mrb[0].mxu0
  %129 = vmatprep.mubr.f32.mxu0 0.0
  %v130 = vand.u32 %v38, 4294901760
  %v131 = vsub.f32 %v38, %v130
  %v132 = vand.u32 %v131, 4294901760
  %v133 = vsub.f32 %v131, %v132
  %v134 = vand.u32 %v133, 4294901760
  %135 = vmatmul.mubr.f32.gmra.mrb[0].mxu0 %v134
  %v136 = vpop.f32.mrb[0].mxu0
  %v137 = vadd.f32 0.0, %v136
  %v138 = vpop.f32.mrb[0].mxu0
  %139 = vmatprep.mubr.f32.mxu0 0.0
  %v140 = vand.u32 %v41, 4294901760
  %v141 = vsub.f32 %v41, %v140
  %v142 = vand.u32 %v141, 4294901760
  %v143 = vsub.f32 %v141, %v142
  %v144 = vand.u32 %v143, 4294901760
  %145 = vmatmul.mubr.f32.gmra.mrb[0].mxu0 %v144
  %v146 = vpop.f32.mrb[0].mxu0
  %v147 = vadd.f32 0.0, %v146
  %v148 = vpop.f32.mrb[0].mxu0
  %149 = vdwg.mxu0
  %150 = vmatprep.subr.mxu0 0.0
  %v151 = vand.u32 %v23, 4294901760
  %v152 = vsub.f32 %v23, %v151
  %v153 = vand.u32 %v152, 4294901760
  %v154 = vsub.f32 %v152, %v153
  %v155 = vand.u32 %v154, 4294901760
  %156 = vmatpush1.msra.mxu0 %v155
  %157 = vmatprep.subr.mxu0 0.0
  %v158 = vand.u32 %v24, 4294901760
  %v159 = vsub.f32 %v24, %v158
  %v160 = vand.u32 %v159, 4294901760
  %v161 = vsub.f32 %v159, %v160
  %v162 = vand.u32 %v161, 4294901760
  %163 = vmatpush1.msra.mxu0 %v162
  %164 = vmatprep.subr.mxu0 0.0
  %165 = vmatpush1.msra.mxu0 0.0
  %166 = vmatprep.subr.mxu0 0.0
  %167 = vmatpush1.msra.mxu0 0.0
  %168 = vmatprep.subr.mxu0 0.0
  %169 = vmatpush1.msra.mxu0 0.0
  %170 = vmatprep.subr.mxu0 0.0
  %171 = vmatpush1.msra.mxu0 0.0
  %172 = vmatprep.subr.mxu0 0.0
  %173 = vmatpush1.msra.mxu0 0.0
  %174 = vmatprep.subr.mxu0 0.0
  %175 = vmatpush1.msra.mxu0 0.0
  %176 = vmatprep.subr.mxu0 0.0
  %177 = vmatpush1.msra.mxu0 0.0
  %178 = vmatprep.subr.mxu0 0.0
  %179 = vmatpush1.msra.mxu0 0.0
  %180 = vmatprep.subr.mxu0 0.0
  %181 = vmatpush1.msra.mxu0 0.0
  %182 = vmatprep.subr.mxu0 0.0
  %183 = vmatpush1.msra.mxu0 0.0
  %184 = vmatprep.subr.mxu0 0.0
  %185 = vmatpush1.msra.mxu0 0.0
  %186 = vmatprep.subr.mxu0 0.0
  %187 = vmatpush1.msra.mxu0 0.0
  %188 = vmatprep.subr.mxu0 0.0
  %189 = vmatpush1.msra.mxu0 0.0
  %190 = vmatprep.subr.mxu0 0.0
  %191 = vmatpush1.msra.mxu0 0.0
  %192 = vmatprep.subr.mxu0 0.0
  %193 = vmatpush1.msra.mxu0 0.0
  %194 = vmatprep.subr.mxu0 0.0
  %195 = vmatpush1.msra.mxu0 0.0
  %196 = vmatprep.subr.mxu0 0.0
  %197 = vmatpush1.msra.mxu0 0.0
  %198 = vmatprep.subr.mxu0 0.0
  %199 = vmatpush1.msra.mxu0 0.0
  %200 = vmatprep.subr.mxu0 0.0
  %201 = vmatpush1.msra.mxu0 0.0
  %202 = vmatprep.subr.mxu0 0.0
  %203 = vmatpush1.msra.mxu0 0.0
  %204 = vmatprep.subr.mxu0 0.0
  %205 = vmatpush1.msra.mxu0 0.0
  %206 = vmatprep.subr.mxu0 0.0
  %207 = vmatpush1.msra.mxu0 0.0
  %208 = vmatprep.subr.mxu0 0.0
  %209 = vmatpush1.msra.mxu0 0.0
  %210 = vmatprep.subr.mxu0 0.0
  %211 = vmatpush1.msra.mxu0 0.0
  %212 = vmatprep.subr.mxu0 0.0
  %213 = vmatpush1.msra.mxu0 0.0
  %214 = vmatprep.subr.mxu0 0.0
  %215 = vmatpush1.msra.mxu0 0.0
  %216 = vmatprep.subr.mxu0 0.0
  %217 = vmatpush1.msra.mxu0 0.0
  %218 = vmatprep.subr.mxu0 0.0
  %219 = vmatpush1.msra.mxu0 0.0
  %220 = vmatprep.subr.mxu0 0.0
  %221 = vmatpush1.msra.mxu0 0.0
  %222 = vmatprep.subr.mxu0 0.0
  %223 = vmatpush1.msra.mxu0 0.0
  %224 = vmatprep.mubr.f32.mxu0 0.0
  %v225 = vand.u32 %v32, 4294901760
  %226 = vmatmul.mubr.f32.gmra.mrb[0].mxu0 %v225
  %v227 = vpop.f32.mrb[0].mxu0
  %v228 = vadd.f32 %v117, %v227
  %v229 = vpop.f32.mrb[0].mxu0
  %230 = vmatprep.mubr.f32.mxu0 0.0
  %v231 = vand.u32 %v35, 4294901760
  %232 = vmatmul.mubr.f32.gmra.mrb[0].mxu0 %v231
  %v233 = vpop.f32.mrb[0].mxu0
  %v234 = vadd.f32 %v127, %v233
  %v235 = vpop.f32.mrb[0].mxu0
  %236 = vmatprep.mubr.f32.mxu0 0.0
  %v237 = vand.u32 %v38, 4294901760
  %238 = vmatmul.mubr.f32.gmra.mrb[0].mxu0 %v237
  %v239 = vpop.f32.mrb[0].mxu0
  %v240 = vadd.f32 %v137, %v239
  %v241 = vpop.f32.mrb[0].mxu0
  %242 = vmatprep.mubr.f32.mxu0 0.0
  %v243 = vand.u32 %v41, 4294901760
  %244 = vmatmul.mubr.f32.gmra.mrb[0].mxu0 %v243
  %v245 = vpop.f32.mrb[0].mxu0
  %v246 = vadd.f32 %v147, %v245
  %v247 = vpop.f32.mrb[0].mxu0
  %248 = vdwg.mxu0
  %249 = vmatprep.subr.mxu0 0.0
  %v250 = vand.u32 %v23, 4294901760
  %v251 = vsub.f32 %v23, %v250
  %252 = vmatpush1.msra.mxu0 %v251
  %253 = vmatprep.subr.mxu0 0.0
  %v254 = vand.u32 %v24, 4294901760
  %v255 = vsub.f32 %v24, %v254
  %256 = vmatpush1.msra.mxu0 %v255
  %257 = vmatprep.subr.mxu0 0.0
  %258 = vmatpush1.msra.mxu0 0.0
  %259 = vmatprep.subr.mxu0 0.0
  %260 = vmatpush1.msra.mxu0 0.0
  %261 = vmatprep.subr.mxu0 0.0
  %262 = vmatpush1.msra.mxu0 0.0
  %263 = vmatprep.subr.mxu0 0.0
  %264 = vmatpush1.msra.mxu0 0.0
  %265 = vmatprep.subr.mxu0 0.0
  %266 = vmatpush1.msra.mxu0 0.0
  %267 = vmatprep.subr.mxu0 0.0
  %268 = vmatpush1.msra.mxu0 0.0
  %269 = vmatprep.subr.mxu0 0.0
  %270 = vmatpush1.msra.mxu0 0.0
  %271 = vmatprep.subr.mxu0 0.0
  %272 = vmatpush1.msra.mxu0 0.0
  %273 = vmatprep.subr.mxu0 0.0
  %274 = vmatpush1.msra.mxu0 0.0
  %275 = vmatprep.subr.mxu0 0.0
  %276 = vmatpush1.msra.mxu0 0.0
  %277 = vmatprep.subr.mxu0 0.0
  %278 = vmatpush1.msra.mxu0 0.0
  %279 = vmatprep.subr.mxu0 0.0
  %280 = vmatpush1.msra.mxu0 0.0
  %281 = vmatprep.subr.mxu0 0.0
  %282 = vmatpush1.msra.mxu0 0.0
  %283 = vmatprep.subr.mxu0 0.0
  %284 = vmatpush1.msra.mxu0 0.0
  %285 = vmatprep.subr.mxu0 0.0
  %286 = vmatpush1.msra.mxu0 0.0
  %287 = vmatprep.subr.mxu0 0.0
  %288 = vmatpush1.msra.mxu0 0.0
  %289 = vmatprep.subr.mxu0 0.0
  %290 = vmatpush1.msra.mxu0 0.0
  %291 = vmatprep.subr.mxu0 0.0
  %292 = vmatpush1.msra.mxu0 0.0
  %293 = vmatprep.subr.mxu0 0.0
  %294 = vmatpush1.msra.mxu0 0.0
  %295 = vmatprep.subr.mxu0 0.0
  %296 = vmatpush1.msra.mxu0 0.0
  %297 = vmatprep.subr.mxu0 0.0
  %298 = vmatpush1.msra.mxu0 0.0
  %299 = vmatprep.subr.mxu0 0.0
  %300 = vmatpush1.msra.mxu0 0.0
  %301 = vmatprep.subr.mxu0 0.0
  %302 = vmatpush1.msra.mxu0 0.0
  %303 = vmatprep.subr.mxu0 0.0
  %304 = vmatpush1.msra.mxu0 0.0
  %305 = vmatprep.subr.mxu0 0.0
  %306 = vmatpush1.msra.mxu0 0.0
  %307 = vmatprep.subr.mxu0 0.0
  %308 = vmatpush1.msra.mxu0 0.0
  %309 = vmatprep.subr.mxu0 0.0
  %310 = vmatpush1.msra.mxu0 0.0
  %311 = vmatprep.subr.mxu0 0.0
  %312 = vmatpush1.msra.mxu0 0.0
  %313 = vmatprep.subr.mxu0 0.0
  %314 = vmatpush1.msra.mxu0 0.0
  %315 = vmatprep.subr.mxu0 0.0
  %316 = vmatpush1.msra.mxu0 0.0
  %317 = vmatprep.mubr.f32.mxu0 0.0
  %v318 = vand.u32 %v32, 4294901760
  %v319 = vsub.f32 %v32, %v318
  %320 = vmatmul.mubr.f32.gmra.mrb[0].mxu0 %v319
  %v321 = vpop.f32.mrb[0].mxu0
  %v322 = vadd.f32 %v228, %v321
  %v323 = vpop.f32.mrb[0].mxu0
  %324 = vmatprep.mubr.f32.mxu0 0.0
  %v325 = vand.u32 %v35, 4294901760
  %v326 = vsub.f32 %v35, %v325
  %327 = vmatmul.mubr.f32.gmra.mrb[0].mxu0 %v326
  %v328 = vpop.f32.mrb[0].mxu0
  %v329 = vadd.f32 %v234, %v328
  %v330 = vpop.f32.mrb[0].mxu0
  %331 = vmatprep.mubr.f32.mxu0 0.0
  %v332 = vand.u32 %v38, 4294901760
  %v333 = vsub.f32 %v38, %v332
  %334 = vmatmul.mubr.f32.gmra.mrb[0].mxu0 %v333
  %v335 = vpop.f32.mrb[0].mxu0
  %v336 = vadd.f32 %v240, %v335
  %v337 = vpop.f32.mrb[0].mxu0
  %338 = vmatprep.mubr.f32.mxu0 0.0
  %v339 = vand.u32 %v41, 4294901760
  %v340 = vsub.f32 %v41, %v339
  %341 = vmatmul.mubr.f32.gmra.mrb[0].mxu0 %v340
  %v342 = vpop.f32.mrb[0].mxu0
  %v343 = vadd.f32 %v246, %v342
  %v344 = vpop.f32.mrb[0].mxu0
  %345 = vdwg.mxu0
  %346 = vmatprep.subr.mxu0 0.0
  %v347 = vand.u32 %v23, 4294901760
  %348 = vmatpush1.msra.mxu0 %v347
  %349 = vmatprep.subr.mxu0 0.0
  %v350 = vand.u32 %v24, 4294901760
  %351 = vmatpush1.msra.mxu0 %v350
  %352 = vmatprep.subr.mxu0 0.0
  %353 = vmatpush1.msra.mxu0 0.0
  %354 = vmatprep.subr.mxu0 0.0
  %355 = vmatpush1.msra.mxu0 0.0
  %356 = vmatprep.subr.mxu0 0.0
  %357 = vmatpush1.msra.mxu0 0.0
  %358 = vmatprep.subr.mxu0 0.0
  %359 = vmatpush1.msra.mxu0 0.0
  %360 = vmatprep.subr.mxu0 0.0
  %361 = vmatpush1.msra.mxu0 0.0
  %362 = vmatprep.subr.mxu0 0.0
  %363 = vmatpush1.msra.mxu0 0.0
  %364 = vmatprep.subr.mxu0 0.0
  %365 = vmatpush1.msra.mxu0 0.0
  %366 = vmatprep.subr.mxu0 0.0
  %367 = vmatpush1.msra.mxu0 0.0
  %368 = vmatprep.subr.mxu0 0.0
  %369 = vmatpush1.msra.mxu0 0.0
  %370 = vmatprep.subr.mxu0 0.0
  %371 = vmatpush1.msra.mxu0 0.0
  %372 = vmatprep.subr.mxu0 0.0
  %373 = vmatpush1.msra.mxu0 0.0
  %374 = vmatprep.subr.mxu0 0.0
  %375 = vmatpush1.msra.mxu0 0.0
  %376 = vmatprep.subr.mxu0 0.0
  %377 = vmatpush1.msra.mxu0 0.0
  %378 = vmatprep.subr.mxu0 0.0
  %379 = vmatpush1.msra.mxu0 0.0
  %380 = vmatprep.subr.mxu0 0.0
  %381 = vmatpush1.msra.mxu0 0.0
  %382 = vmatprep.subr.mxu0 0.0
  %383 = vmatpush1.msra.mxu0 0.0
  %384 = vmatprep.subr.mxu0 0.0
  %385 = vmatpush1.msra.mxu0 0.0
  %386 = vmatprep.subr.mxu0 0.0
  %387 = vmatpush1.msra.mxu0 0.0
  %388 = vmatprep.subr.mxu0 0.0
  %389 = vmatpush1.msra.mxu0 0.0
  %390 = vmatprep.subr.mxu0 0.0
  %391 = vmatpush1.msra.mxu0 0.0
  %392 = vmatprep.subr.mxu0 0.0
  %393 = vmatpush1.msra.mxu0 0.0
  %394 = vmatprep.subr.mxu0 0.0
  %395 = vmatpush1.msra.mxu0 0.0
  %396 = vmatprep.subr.mxu0 0.0
  %397 = vmatpush1.msra.mxu0 0.0
  %398 = vmatprep.subr.mxu0 0.0
  %399 = vmatpush1.msra.mxu0 0.0
  %400 = vmatprep.subr.mxu0 0.0
  %401 = vmatpush1.msra.mxu0 0.0
  %402 = vmatprep.subr.mxu0 0.0
  %403 = vmatpush1.msra.mxu0 0.0
  %404 = vmatprep.subr.mxu0 0.0
  %405 = vmatpush1.msra.mxu0 0.0
  %406 = vmatprep.subr.mxu0 0.0
  %407 = vmatpush1.msra.mxu0 0.0
  %408 = vmatprep.subr.mxu0 0.0
  %409 = vmatpush1.msra.mxu0 0.0
  %410 = vmatprep.subr.mxu0 0.0
  %411 = vmatpush1.msra.mxu0 0.0
  %412 = vmatprep.mubr.f32.mxu0 0.0
  %v413 = vand.u32 %v32, 4294901760
  %v414 = vsub.f32 %v32, %v413
  %v415 = vand.u32 %v414, 4294901760
  %416 = vmatmul.mubr.f32.gmra.mrb[0].mxu0 %v415
  %v417 = vpop.f32.mrb[0].mxu0
  %v418 = vadd.f32 %v322, %v417
  %v419 = vpop.f32.mrb[0].mxu0
  %420 = vmatprep.mubr.f32.mxu0 0.0
  %v421 = vand.u32 %v35, 4294901760
  %v422 = vsub.f32 %v35, %v421
  %v423 = vand.u32 %v422, 4294901760
  %424 = vmatmul.mubr.f32.gmra.mrb[0].mxu0 %v423
  %v425 = vpop.f32.mrb[0].mxu0
  %v426 = vadd.f32 %v329, %v425
  %v427 = vpop.f32.mrb[0].mxu0
  %428 = vmatprep.mubr.f32.mxu0 0.0
  %v429 = vand.u32 %v38, 4294901760
  %v430 = vsub.f32 %v38, %v429
  %v431 = vand.u32 %v430, 4294901760
  %432 = vmatmul.mubr.f32.gmra.mrb[0].mxu0 %v431
  %v433 = vpop.f32.mrb[0].mxu0
  %v434 = vadd.f32 %v336, %v433
  %v435 = vpop.f32.mrb[0].mxu0
  %436 = vmatprep.mubr.f32.mxu0 0.0
  %v437 = vand.u32 %v41, 4294901760
  %v438 = vsub.f32 %v41, %v437
  %v439 = vand.u32 %v438, 4294901760
  %440 = vmatmul.mubr.f32.gmra.mrb[0].mxu0 %v439
  %v441 = vpop.f32.mrb[0].mxu0
  %v442 = vadd.f32 %v343, %v441
  %v443 = vpop.f32.mrb[0].mxu0
  %444 = vdwg.mxu0
  %445 = vmatprep.subr.mxu0 0.0
  %v446 = vand.u32 %v23, 4294901760
  %v447 = vsub.f32 %v23, %v446
  %v448 = vand.u32 %v447, 4294901760
  %449 = vmatpush1.msra.mxu0 %v448
  %450 = vmatprep.subr.mxu0 0.0
  %v451 = vand.u32 %v24, 4294901760
  %v452 = vsub.f32 %v24, %v451
  %v453 = vand.u32 %v452, 4294901760
  %454 = vmatpush1.msra.mxu0 %v453
  %455 = vmatprep.subr.mxu0 0.0
  %456 = vmatpush1.msra.mxu0 0.0
  %457 = vmatprep.subr.mxu0 0.0
  %458 = vmatpush1.msra.mxu0 0.0
  %459 = vmatprep.subr.mxu0 0.0
  %460 = vmatpush1.msra.mxu0 0.0
  %461 = vmatprep.subr.mxu0 0.0
  %462 = vmatpush1.msra.mxu0 0.0
  %463 = vmatprep.subr.mxu0 0.0
  %464 = vmatpush1.msra.mxu0 0.0
  %465 = vmatprep.subr.mxu0 0.0
  %466 = vmatpush1.msra.mxu0 0.0
  %467 = vmatprep.subr.mxu0 0.0
  %468 = vmatpush1.msra.mxu0 0.0
  %469 = vmatprep.subr.mxu0 0.0
  %470 = vmatpush1.msra.mxu0 0.0
  %471 = vmatprep.subr.mxu0 0.0
  %472 = vmatpush1.msra.mxu0 0.0
  %473 = vmatprep.subr.mxu0 0.0
  %474 = vmatpush1.msra.mxu0 0.0
  %475 = vmatprep.subr.mxu0 0.0
  %476 = vmatpush1.msra.mxu0 0.0
  %477 = vmatprep.subr.mxu0 0.0
  %478 = vmatpush1.msra.mxu0 0.0
  %479 = vmatprep.subr.mxu0 0.0
  %480 = vmatpush1.msra.mxu0 0.0
  %481 = vmatprep.subr.mxu0 0.0
  %482 = vmatpush1.msra.mxu0 0.0
  %483 = vmatprep.subr.mxu0 0.0
  %484 = vmatpush1.msra.mxu0 0.0
  %485 = vmatprep.subr.mxu0 0.0
  %486 = vmatpush1.msra.mxu0 0.0
  %487 = vmatprep.subr.mxu0 0.0
  %488 = vmatpush1.msra.mxu0 0.0
  %489 = vmatprep.subr.mxu0 0.0
  %490 = vmatpush1.msra.mxu0 0.0
  %491 = vmatprep.subr.mxu0 0.0
  %492 = vmatpush1.msra.mxu0 0.0
  %493 = vmatprep.subr.mxu0 0.0
  %494 = vmatpush1.msra.mxu0 0.0
  %495 = vmatprep.subr.mxu0 0.0
  %496 = vmatpush1.msra.mxu0 0.0
  %497 = vmatprep.subr.mxu0 0.0
  %498 = vmatpush1.msra.mxu0 0.0
  %499 = vmatprep.subr.mxu0 0.0
  %500 = vmatpush1.msra.mxu0 0.0
  %501 = vmatprep.subr.mxu0 0.0
  %502 = vmatpush1.msra.mxu0 0.0
  %503 = vmatprep.subr.mxu0 0.0
  %504 = vmatpush1.msra.mxu0 0.0
  %505 = vmatprep.subr.mxu0 0.0
  %506 = vmatpush1.msra.mxu0 0.0
  %507 = vmatprep.subr.mxu0 0.0
  %508 = vmatpush1.msra.mxu0 0.0
  %509 = vmatprep.subr.mxu0 0.0
  %510 = vmatpush1.msra.mxu0 0.0
  %511 = vmatprep.subr.mxu0 0.0
  %512 = vmatpush1.msra.mxu0 0.0
  %513 = vmatprep.subr.mxu0 0.0
  %514 = vmatpush1.msra.mxu0 0.0
  %515 = vmatprep.mubr.f32.mxu0 0.0
  %v516 = vand.u32 %v32, 4294901760
  %517 = vmatmul.mubr.f32.gmra.mrb[0].mxu0 %v516
  %v518 = vpop.f32.mrb[0].mxu0
  %v519 = vadd.f32 %v418, %v518
  %v520 = vpop.f32.mrb[0].mxu0
  %521 = vmatprep.mubr.f32.mxu0 0.0
  %v522 = vand.u32 %v35, 4294901760
  %523 = vmatmul.mubr.f32.gmra.mrb[0].mxu0 %v522
  %v524 = vpop.f32.mrb[0].mxu0
  %v525 = vadd.f32 %v426, %v524
  %v526 = vpop.f32.mrb[0].mxu0
  %527 = vmatprep.mubr.f32.mxu0 0.0
  %v528 = vand.u32 %v38, 4294901760
  %529 = vmatmul.mubr.f32.gmra.mrb[0].mxu0 %v528
  %v530 = vpop.f32.mrb[0].mxu0
  %v531 = vadd.f32 %v434, %v530
  %v532 = vpop.f32.mrb[0].mxu0
  %533 = vmatprep.mubr.f32.mxu0 0.0
  %v534 = vand.u32 %v41, 4294901760
  %535 = vmatmul.mubr.f32.gmra.mrb[0].mxu0 %v534
  %v536 = vpop.f32.mrb[0].mxu0
  %v537 = vadd.f32 %v442, %v536
  %v538 = vpop.f32.mrb[0].mxu0
  %539 = vdwg.mxu0
  %540 = vmatprep.subr.mxu0 0.0
  %v541 = vand.u32 %v23, 4294901760
  %542 = vmatpush1.msra.mxu0 %v541
  %543 = vmatprep.subr.mxu0 0.0
  %v544 = vand.u32 %v24, 4294901760
  %545 = vmatpush1.msra.mxu0 %v544
  %546 = vmatprep.subr.mxu0 0.0
  %547 = vmatpush1.msra.mxu0 0.0
  %548 = vmatprep.subr.mxu0 0.0
  %549 = vmatpush1.msra.mxu0 0.0
  %550 = vmatprep.subr.mxu0 0.0
  %551 = vmatpush1.msra.mxu0 0.0
  %552 = vmatprep.subr.mxu0 0.0
  %553 = vmatpush1.msra.mxu0 0.0
  %554 = vmatprep.subr.mxu0 0.0
  %555 = vmatpush1.msra.mxu0 0.0
  %556 = vmatprep.subr.mxu0 0.0
  %557 = vmatpush1.msra.mxu0 0.0
  %558 = vmatprep.subr.mxu0 0.0
  %559 = vmatpush1.msra.mxu0 0.0
  %560 = vmatprep.subr.mxu0 0.0
  %561 = vmatpush1.msra.mxu0 0.0
  %562 = vmatprep.subr.mxu0 0.0
  %563 = vmatpush1.msra.mxu0 0.0
  %564 = vmatprep.subr.mxu0 0.0
  %565 = vmatpush1.msra.mxu0 0.0
  %566 = vmatprep.subr.mxu0 0.0
  %567 = vmatpush1.msra.mxu0 0.0
  %568 = vmatprep.subr.mxu0 0.0
  %569 = vmatpush1.msra.mxu0 0.0
  %570 = vmatprep.subr.mxu0 0.0
  %571 = vmatpush1.msra.mxu0 0.0
  %572 = vmatprep.subr.mxu0 0.0
  %573 = vmatpush1.msra.mxu0 0.0
  %574 = vmatprep.subr.mxu0 0.0
  %575 = vmatpush1.msra.mxu0 0.0
  %576 = vmatprep.subr.mxu0 0.0
  %577 = vmatpush1.msra.mxu0 0.0
  %578 = vmatprep.subr.mxu0 0.0
  %579 = vmatpush1.msra.mxu0 0.0
  %580 = vmatprep.subr.mxu0 0.0
  %581 = vmatpush1.msra.mxu0 0.0
  %582 = vmatprep.subr.mxu0 0.0
  %583 = vmatpush1.msra.mxu0 0.0
  %584 = vmatprep.subr.mxu0 0.0
  %585 = vmatpush1.msra.mxu0 0.0
  %586 = vmatprep.subr.mxu0 0.0
  %587 = vmatpush1.msra.mxu0 0.0
  %588 = vmatprep.subr.mxu0 0.0
  %589 = vmatpush1.msra.mxu0 0.0
  %590 = vmatprep.subr.mxu0 0.0
  %591 = vmatpush1.msra.mxu0 0.0
  %592 = vmatprep.subr.mxu0 0.0
  %593 = vmatpush1.msra.mxu0 0.0
  %594 = vmatprep.subr.mxu0 0.0
  %595 = vmatpush1.msra.mxu0 0.0
  %596 = vmatprep.subr.mxu0 0.0
  %597 = vmatpush1.msra.mxu0 0.0
  %598 = vmatprep.subr.mxu0 0.0
  %599 = vmatpush1.msra.mxu0 0.0
  %600 = vmatprep.subr.mxu0 0.0
  %601 = vmatpush1.msra.mxu0 0.0
  %602 = vmatprep.subr.mxu0 0.0
  %603 = vmatpush1.msra.mxu0 0.0
  %604 = vmatprep.subr.mxu0 0.0
  %605 = vmatpush1.msra.mxu0 0.0
  %606 = vmatprep.mubr.f32.mxu0 0.0
  %v607 = vand.u32 %v32, 4294901760
  %608 = vmatmul.mubr.f32.gmra.mrb[0].mxu0 %v607
  %v609 = vpop.f32.mrb[0].mxu0
  %v610 = vadd.f32 %v519, %v609
  %v611 = vpop.f32.mrb[0].mxu0
  %612 = vmatprep.mubr.f32.mxu0 0.0
  %v613 = vand.u32 %v35, 4294901760
  %614 = vmatmul.mubr.f32.gmra.mrb[0].mxu0 %v613
  %v615 = vpop.f32.mrb[0].mxu0
  %v616 = vadd.f32 %v525, %v615
  %v617 = vpop.f32.mrb[0].mxu0
  %618 = vmatprep.mubr.f32.mxu0 0.0
  %v619 = vand.u32 %v38, 4294901760
  %620 = vmatmul.mubr.f32.gmra.mrb[0].mxu0 %v619
  %v621 = vpop.f32.mrb[0].mxu0
  %v622 = vadd.f32 %v531, %v621
  %v623 = vpop.f32.mrb[0].mxu0
  %624 = vmatprep.mubr.f32.mxu0 0.0
  %v625 = vand.u32 %v41, 4294901760
  %626 = vmatmul.mubr.f32.gmra.mrb[0].mxu0 %v625
  %v627 = vpop.f32.mrb[0].mxu0
  %v628 = vadd.f32 %v537, %v627
  %v629 = vpop.f32.mrb[0].mxu0
  %630 = vdwg.mxu0
  %631 = vst [vmem:[%s5] sm:$0xff] %v610
  %632 = vst [vmem:[%s5 + $0x8] sm:$0xff] %v616
  %633 = vst [vmem:[%s5 + $0x10] sm:$0xff] %v622
  %634 = vst [vmem:[%s5 + $0x18] sm:$0xff] %v628
  %v636 = vlaneseq
  %v637 = vshrl.u32 %v636, 7
  %v638 = vsub.s32 0, %v637
  %v639 = vrot.slane %v25, %v638
  %v641 = vmul.f32 %v23, %v639
  %v642 = vmul.f32 %v24, %v639
  %vm643 = vcmask 523264
  %v644 = vsel %vm643, %v641, 0.0
  %645 = vadd.xlane.f32.xlu0 %v644
  %v646 = vpop.xlane.xlu0 %645
  %v647 = vsel %vm643, %v642, 0.0
  %648 = vadd.xlane.f32.xlu0 %v647
  %v649 = vpop.xlane.xlu0 %648
  %vm650 = vcmask 516096
  %v651 = vsel %vm650, %v25, 0.0
  %652 = vadd.xlane.f32.xlu0 %v651
  %v653 = vpop.xlane.xlu0 %652
  %656 = vrot.lane.b32.xlu0 %v641, 64
  %v657 = vpop.permute.xlu0 %656
  %658 = vrot.lane.b32.xlu0 %v642, 64
  %v659 = vpop.permute.xlu0 %658
  %v662 = vsel %vm643, %v657, 0.0
  %663 = vadd.xlane.f32.xlu0 %v662
  %v664 = vpop.xlane.xlu0 %663
  %v665 = vsel %vm643, %v659, 0.0
  %666 = vadd.xlane.f32.xlu0 %v665
  %v667 = vpop.xlane.xlu0 %666
  %668 = vrot.lane.b32.xlu0 %v639, 64
  %v669 = vpop.permute.xlu0 %668
  %v671 = vsel %vm650, %v669, 0.0
  %672 = vadd.xlane.f32.xlu0 %v671
  %v673 = vpop.xlane.xlu0 %672
  %vm674 = vcmask 7168
  %v675 = vsel %vm674, %v646, %v664
  %v676 = vsel %vm674, %v649, %v667
  %v677 = vsel %vm674, %v653, %v673
  %v678 = vlaneseq
  %v679 = vshrl.u32 %v678, 7
  %v680 = vsub.s32 0, %v679
  %v681 = vrot.slane %v677, %v680
  %v682 = vrcp.pop %v681
  %v683 = vmul.f32 %v675, %v682
  %v684 = vmul.f32 %v676, %v682
  %vm685 = vcmask 15360
  %686 = vst.msk [vmem:[%s7] sm:$0xff] %vm685, %v683
  %687 = vst.msk [vmem:[%s7 + $0x8] sm:$0xff] %vm685, %v684
  %v688 = vld [vmem:[%s3] sm:$0xff]
  %v689 = vld [vmem:[%s3 + $0x8] sm:$0xff]
  %v690 = vld [vmem:[%s3 + $0x10] sm:$0xff]
  %v691 = vld [vmem:[%s3 + $0x18] sm:$0xff]
  %v692 = vld [vmem:[%s4] sm:$0xff]
  %v693 = vld [vmem:[%s4 + $0x8] sm:$0xff]
  %v694 = vld [vmem:[%s4 + $0x10] sm:$0xff]
  %v695 = vld [vmem:[%s4 + $0x18] sm:$0xff]
  %697 = vset.pattern.permute.xlu0 0
  %698 = vperm.xlu0 %697, %v692
  %v699 = vpop.permute.xlu0 %698
  %702 = vset.pattern.permute.xlu0 0
  %703 = vperm.xlu0 %702, %v693
  %v704 = vpop.permute.xlu0 %703
  %707 = vset.pattern.permute.xlu0 0
  %708 = vperm.xlu0 %707, %v694
  %v709 = vpop.permute.xlu0 %708
  %712 = vset.pattern.permute.xlu0 0
  %713 = vperm.xlu0 %712, %v695
  %v714 = vpop.permute.xlu0 %713
  %v717 = vsel %vm30, %v688, 0
  %v720 = vsel %vm30, %v689, 0
  %v723 = vsel %vm30, %v690, 0
  %v726 = vsel %vm30, %v691, 0
  %728 = vmatprep.subr.mxu0 0.0
  %v729 = vand.u32 %v683, 4294901760
  %730 = vmatpush1.msra.mxu0 %v729
  %731 = vmatprep.subr.mxu0 0.0
  %v732 = vand.u32 %v684, 4294901760
  %733 = vmatpush1.msra.mxu0 %v732
  %734 = vmatprep.subr.mxu0 0.0
  %735 = vmatpush1.msra.mxu0 0.0
  %736 = vmatprep.subr.mxu0 0.0
  %737 = vmatpush1.msra.mxu0 0.0
  %738 = vmatprep.subr.mxu0 0.0
  %739 = vmatpush1.msra.mxu0 0.0
  %740 = vmatprep.subr.mxu0 0.0
  %741 = vmatpush1.msra.mxu0 0.0
  %742 = vmatprep.subr.mxu0 0.0
  %743 = vmatpush1.msra.mxu0 0.0
  %744 = vmatprep.subr.mxu0 0.0
  %745 = vmatpush1.msra.mxu0 0.0
  %746 = vmatprep.subr.mxu0 0.0
  %747 = vmatpush1.msra.mxu0 0.0
  %748 = vmatprep.subr.mxu0 0.0
  %749 = vmatpush1.msra.mxu0 0.0
  %750 = vmatprep.subr.mxu0 0.0
  %751 = vmatpush1.msra.mxu0 0.0
  %752 = vmatprep.subr.mxu0 0.0
  %753 = vmatpush1.msra.mxu0 0.0
  %754 = vmatprep.subr.mxu0 0.0
  %755 = vmatpush1.msra.mxu0 0.0
  %756 = vmatprep.subr.mxu0 0.0
  %757 = vmatpush1.msra.mxu0 0.0
  %758 = vmatprep.subr.mxu0 0.0
  %759 = vmatpush1.msra.mxu0 0.0
  %760 = vmatprep.subr.mxu0 0.0
  %761 = vmatpush1.msra.mxu0 0.0
  %762 = vmatprep.subr.mxu0 0.0
  %763 = vmatpush1.msra.mxu0 0.0
  %764 = vmatprep.subr.mxu0 0.0
  %765 = vmatpush1.msra.mxu0 0.0
  %766 = vmatprep.subr.mxu0 0.0
  %767 = vmatpush1.msra.mxu0 0.0
  %768 = vmatprep.subr.mxu0 0.0
  %769 = vmatpush1.msra.mxu0 0.0
  %770 = vmatprep.subr.mxu0 0.0
  %771 = vmatpush1.msra.mxu0 0.0
  %772 = vmatprep.subr.mxu0 0.0
  %773 = vmatpush1.msra.mxu0 0.0
  %774 = vmatprep.subr.mxu0 0.0
  %775 = vmatpush1.msra.mxu0 0.0
  %776 = vmatprep.subr.mxu0 0.0
  %777 = vmatpush1.msra.mxu0 0.0
  %778 = vmatprep.subr.mxu0 0.0
  %779 = vmatpush1.msra.mxu0 0.0
  %780 = vmatprep.subr.mxu0 0.0
  %781 = vmatpush1.msra.mxu0 0.0
  %782 = vmatprep.subr.mxu0 0.0
  %783 = vmatpush1.msra.mxu0 0.0
  %784 = vmatprep.subr.mxu0 0.0
  %785 = vmatpush1.msra.mxu0 0.0
  %786 = vmatprep.subr.mxu0 0.0
  %787 = vmatpush1.msra.mxu0 0.0
  %788 = vmatprep.subr.mxu0 0.0
  %789 = vmatpush1.msra.mxu0 0.0
  %790 = vmatprep.subr.mxu0 0.0
  %791 = vmatpush1.msra.mxu0 0.0
  %792 = vmatprep.subr.mxu0 0.0
  %793 = vmatpush1.msra.mxu0 0.0
  %794 = vmatprep.mubr.f32.mxu0 0.0
  %v795 = vand.u32 %v717, 4294901760
  %v796 = vsub.f32 %v717, %v795
  %v797 = vand.u32 %v796, 4294901760
  %v798 = vsub.f32 %v796, %v797
  %v799 = vand.u32 %v798, 4294901760
  %800 = vmatmul.mubr.f32.gmra.mrb[0].mxu0 %v799
  %v801 = vpop.f32.mrb[0].mxu0
  %v802 = vadd.f32 %v699, %v801
  %v803 = vpop.f32.mrb[0].mxu0
  %804 = vmatprep.mubr.f32.mxu0 0.0
  %v805 = vand.u32 %v720, 4294901760
  %v806 = vsub.f32 %v720, %v805
  %v807 = vand.u32 %v806, 4294901760
  %v808 = vsub.f32 %v806, %v807
  %v809 = vand.u32 %v808, 4294901760
  %810 = vmatmul.mubr.f32.gmra.mrb[0].mxu0 %v809
  %v811 = vpop.f32.mrb[0].mxu0
  %v812 = vadd.f32 %v704, %v811
  %v813 = vpop.f32.mrb[0].mxu0
  %814 = vmatprep.mubr.f32.mxu0 0.0
  %v815 = vand.u32 %v723, 4294901760
  %v816 = vsub.f32 %v723, %v815
  %v817 = vand.u32 %v816, 4294901760
  %v818 = vsub.f32 %v816, %v817
  %v819 = vand.u32 %v818, 4294901760
  %820 = vmatmul.mubr.f32.gmra.mrb[0].mxu0 %v819
  %v821 = vpop.f32.mrb[0].mxu0
  %v822 = vadd.f32 %v709, %v821
  %v823 = vpop.f32.mrb[0].mxu0
  %824 = vmatprep.mubr.f32.mxu0 0.0
  %v825 = vand.u32 %v726, 4294901760
  %v826 = vsub.f32 %v726, %v825
  %v827 = vand.u32 %v826, 4294901760
  %v828 = vsub.f32 %v826, %v827
  %v829 = vand.u32 %v828, 4294901760
  %830 = vmatmul.mubr.f32.gmra.mrb[0].mxu0 %v829
  %v831 = vpop.f32.mrb[0].mxu0
  %v832 = vadd.f32 %v714, %v831
  %v833 = vpop.f32.mrb[0].mxu0
  %834 = vdwg.mxu0
  %835 = vmatprep.subr.mxu0 0.0
  %v836 = vand.u32 %v683, 4294901760
  %v837 = vsub.f32 %v683, %v836
  %v838 = vand.u32 %v837, 4294901760
  %v839 = vsub.f32 %v837, %v838
  %v840 = vand.u32 %v839, 4294901760
  %841 = vmatpush1.msra.mxu0 %v840
  %842 = vmatprep.subr.mxu0 0.0
  %v843 = vand.u32 %v684, 4294901760
  %v844 = vsub.f32 %v684, %v843
  %v845 = vand.u32 %v844, 4294901760
  %v846 = vsub.f32 %v844, %v845
  %v847 = vand.u32 %v846, 4294901760
  %848 = vmatpush1.msra.mxu0 %v847
  %849 = vmatprep.subr.mxu0 0.0
  %850 = vmatpush1.msra.mxu0 0.0
  %851 = vmatprep.subr.mxu0 0.0
  %852 = vmatpush1.msra.mxu0 0.0
  %853 = vmatprep.subr.mxu0 0.0
  %854 = vmatpush1.msra.mxu0 0.0
  %855 = vmatprep.subr.mxu0 0.0
  %856 = vmatpush1.msra.mxu0 0.0
  %857 = vmatprep.subr.mxu0 0.0
  %858 = vmatpush1.msra.mxu0 0.0
  %859 = vmatprep.subr.mxu0 0.0
  %860 = vmatpush1.msra.mxu0 0.0
  %861 = vmatprep.subr.mxu0 0.0
  %862 = vmatpush1.msra.mxu0 0.0
  %863 = vmatprep.subr.mxu0 0.0
  %864 = vmatpush1.msra.mxu0 0.0
  %865 = vmatprep.subr.mxu0 0.0
  %866 = vmatpush1.msra.mxu0 0.0
  %867 = vmatprep.subr.mxu0 0.0
  %868 = vmatpush1.msra.mxu0 0.0
  %869 = vmatprep.subr.mxu0 0.0
  %870 = vmatpush1.msra.mxu0 0.0
  %871 = vmatprep.subr.mxu0 0.0
  %872 = vmatpush1.msra.mxu0 0.0
  %873 = vmatprep.subr.mxu0 0.0
  %874 = vmatpush1.msra.mxu0 0.0
  %875 = vmatprep.subr.mxu0 0.0
  %876 = vmatpush1.msra.mxu0 0.0
  %877 = vmatprep.subr.mxu0 0.0
  %878 = vmatpush1.msra.mxu0 0.0
  %879 = vmatprep.subr.mxu0 0.0
  %880 = vmatpush1.msra.mxu0 0.0
  %881 = vmatprep.subr.mxu0 0.0
  %882 = vmatpush1.msra.mxu0 0.0
  %883 = vmatprep.subr.mxu0 0.0
  %884 = vmatpush1.msra.mxu0 0.0
  %885 = vmatprep.subr.mxu0 0.0
  %886 = vmatpush1.msra.mxu0 0.0
  %887 = vmatprep.subr.mxu0 0.0
  %888 = vmatpush1.msra.mxu0 0.0
  %889 = vmatprep.subr.mxu0 0.0
  %890 = vmatpush1.msra.mxu0 0.0
  %891 = vmatprep.subr.mxu0 0.0
  %892 = vmatpush1.msra.mxu0 0.0
  %893 = vmatprep.subr.mxu0 0.0
  %894 = vmatpush1.msra.mxu0 0.0
  %895 = vmatprep.subr.mxu0 0.0
  %896 = vmatpush1.msra.mxu0 0.0
  %897 = vmatprep.subr.mxu0 0.0
  %898 = vmatpush1.msra.mxu0 0.0
  %899 = vmatprep.subr.mxu0 0.0
  %900 = vmatpush1.msra.mxu0 0.0
  %901 = vmatprep.subr.mxu0 0.0
  %902 = vmatpush1.msra.mxu0 0.0
  %903 = vmatprep.subr.mxu0 0.0
  %904 = vmatpush1.msra.mxu0 0.0
  %905 = vmatprep.subr.mxu0 0.0
  %906 = vmatpush1.msra.mxu0 0.0
  %907 = vmatprep.subr.mxu0 0.0
  %908 = vmatpush1.msra.mxu0 0.0
  %909 = vmatprep.mubr.f32.mxu0 0.0
  %v910 = vand.u32 %v717, 4294901760
  %911 = vmatmul.mubr.f32.gmra.mrb[0].mxu0 %v910
  %v912 = vpop.f32.mrb[0].mxu0
  %v913 = vadd.f32 %v802, %v912
  %v914 = vpop.f32.mrb[0].mxu0
  %915 = vmatprep.mubr.f32.mxu0 0.0
  %v916 = vand.u32 %v720, 4294901760
  %917 = vmatmul.mubr.f32.gmra.mrb[0].mxu0 %v916
  %v918 = vpop.f32.mrb[0].mxu0
  %v919 = vadd.f32 %v812, %v918
  %v920 = vpop.f32.mrb[0].mxu0
  %921 = vmatprep.mubr.f32.mxu0 0.0
  %v922 = vand.u32 %v723, 4294901760
  %923 = vmatmul.mubr.f32.gmra.mrb[0].mxu0 %v922
  %v924 = vpop.f32.mrb[0].mxu0
  %v925 = vadd.f32 %v822, %v924
  %v926 = vpop.f32.mrb[0].mxu0
  %927 = vmatprep.mubr.f32.mxu0 0.0
  %v928 = vand.u32 %v726, 4294901760
  %929 = vmatmul.mubr.f32.gmra.mrb[0].mxu0 %v928
  %v930 = vpop.f32.mrb[0].mxu0
  %v931 = vadd.f32 %v832, %v930
  %v932 = vpop.f32.mrb[0].mxu0
  %933 = vdwg.mxu0
  %934 = vmatprep.subr.mxu0 0.0
  %v935 = vand.u32 %v683, 4294901760
  %v936 = vsub.f32 %v683, %v935
  %937 = vmatpush1.msra.mxu0 %v936
  %938 = vmatprep.subr.mxu0 0.0
  %v939 = vand.u32 %v684, 4294901760
  %v940 = vsub.f32 %v684, %v939
  %941 = vmatpush1.msra.mxu0 %v940
  %942 = vmatprep.subr.mxu0 0.0
  %943 = vmatpush1.msra.mxu0 0.0
  %944 = vmatprep.subr.mxu0 0.0
  %945 = vmatpush1.msra.mxu0 0.0
  %946 = vmatprep.subr.mxu0 0.0
  %947 = vmatpush1.msra.mxu0 0.0
  %948 = vmatprep.subr.mxu0 0.0
  %949 = vmatpush1.msra.mxu0 0.0
  %950 = vmatprep.subr.mxu0 0.0
  %951 = vmatpush1.msra.mxu0 0.0
  %952 = vmatprep.subr.mxu0 0.0
  %953 = vmatpush1.msra.mxu0 0.0
  %954 = vmatprep.subr.mxu0 0.0
  %955 = vmatpush1.msra.mxu0 0.0
  %956 = vmatprep.subr.mxu0 0.0
  %957 = vmatpush1.msra.mxu0 0.0
  %958 = vmatprep.subr.mxu0 0.0
  %959 = vmatpush1.msra.mxu0 0.0
  %960 = vmatprep.subr.mxu0 0.0
  %961 = vmatpush1.msra.mxu0 0.0
  %962 = vmatprep.subr.mxu0 0.0
  %963 = vmatpush1.msra.mxu0 0.0
  %964 = vmatprep.subr.mxu0 0.0
  %965 = vmatpush1.msra.mxu0 0.0
  %966 = vmatprep.subr.mxu0 0.0
  %967 = vmatpush1.msra.mxu0 0.0
  %968 = vmatprep.subr.mxu0 0.0
  %969 = vmatpush1.msra.mxu0 0.0
  %970 = vmatprep.subr.mxu0 0.0
  %971 = vmatpush1.msra.mxu0 0.0
  %972 = vmatprep.subr.mxu0 0.0
  %973 = vmatpush1.msra.mxu0 0.0
  %974 = vmatprep.subr.mxu0 0.0
  %975 = vmatpush1.msra.mxu0 0.0
  %976 = vmatprep.subr.mxu0 0.0
  %977 = vmatpush1.msra.mxu0 0.0
  %978 = vmatprep.subr.mxu0 0.0
  %979 = vmatpush1.msra.mxu0 0.0
  %980 = vmatprep.subr.mxu0 0.0
  %981 = vmatpush1.msra.mxu0 0.0
  %982 = vmatprep.subr.mxu0 0.0
  %983 = vmatpush1.msra.mxu0 0.0
  %984 = vmatprep.subr.mxu0 0.0
  %985 = vmatpush1.msra.mxu0 0.0
  %986 = vmatprep.subr.mxu0 0.0
  %987 = vmatpush1.msra.mxu0 0.0
  %988 = vmatprep.subr.mxu0 0.0
  %989 = vmatpush1.msra.mxu0 0.0
  %990 = vmatprep.subr.mxu0 0.0
  %991 = vmatpush1.msra.mxu0 0.0
  %992 = vmatprep.subr.mxu0 0.0
  %993 = vmatpush1.msra.mxu0 0.0
  %994 = vmatprep.subr.mxu0 0.0
  %995 = vmatpush1.msra.mxu0 0.0
  %996 = vmatprep.subr.mxu0 0.0
  %997 = vmatpush1.msra.mxu0 0.0
  %998 = vmatprep.subr.mxu0 0.0
  %999 = vmatpush1.msra.mxu0 0.0
  %1000 = vmatprep.subr.mxu0 0.0
  %1001 = vmatpush1.msra.mxu0 0.0
  %1002 = vmatprep.mubr.f32.mxu0 0.0
  %v1003 = vand.u32 %v717, 4294901760
  %v1004 = vsub.f32 %v717, %v1003
  %1005 = vmatmul.mubr.f32.gmra.mrb[0].mxu0 %v1004
  %v1006 = vpop.f32.mrb[0].mxu0
  %v1007 = vadd.f32 %v913, %v1006
  %v1008 = vpop.f32.mrb[0].mxu0
  %1009 = vmatprep.mubr.f32.mxu0 0.0
  %v1010 = vand.u32 %v720, 4294901760
  %v1011 = vsub.f32 %v720, %v1010
  %1012 = vmatmul.mubr.f32.gmra.mrb[0].mxu0 %v1011
  %v1013 = vpop.f32.mrb[0].mxu0
  %v1014 = vadd.f32 %v919, %v1013
  %v1015 = vpop.f32.mrb[0].mxu0
  %1016 = vmatprep.mubr.f32.mxu0 0.0
  %v1017 = vand.u32 %v723, 4294901760
  %v1018 = vsub.f32 %v723, %v1017
  %1019 = vmatmul.mubr.f32.gmra.mrb[0].mxu0 %v1018
  %v1020 = vpop.f32.mrb[0].mxu0
  %v1021 = vadd.f32 %v925, %v1020
  %v1022 = vpop.f32.mrb[0].mxu0
  %1023 = vmatprep.mubr.f32.mxu0 0.0
  %v1024 = vand.u32 %v726, 4294901760
  %v1025 = vsub.f32 %v726, %v1024
  %1026 = vmatmul.mubr.f32.gmra.mrb[0].mxu0 %v1025
  %v1027 = vpop.f32.mrb[0].mxu0
  %v1028 = vadd.f32 %v931, %v1027
  %v1029 = vpop.f32.mrb[0].mxu0
  %1030 = vdwg.mxu0
  %1031 = vmatprep.subr.mxu0 0.0
  %v1032 = vand.u32 %v683, 4294901760
  %1033 = vmatpush1.msra.mxu0 %v1032
  %1034 = vmatprep.subr.mxu0 0.0
  %v1035 = vand.u32 %v684, 4294901760
  %1036 = vmatpush1.msra.mxu0 %v1035
  %1037 = vmatprep.subr.mxu0 0.0
  %1038 = vmatpush1.msra.mxu0 0.0
  %1039 = vmatprep.subr.mxu0 0.0
  %1040 = vmatpush1.msra.mxu0 0.0
  %1041 = vmatprep.subr.mxu0 0.0
  %1042 = vmatpush1.msra.mxu0 0.0
  %1043 = vmatprep.subr.mxu0 0.0
  %1044 = vmatpush1.msra.mxu0 0.0
  %1045 = vmatprep.subr.mxu0 0.0
  %1046 = vmatpush1.msra.mxu0 0.0
  %1047 = vmatprep.subr.mxu0 0.0
  %1048 = vmatpush1.msra.mxu0 0.0
  %1049 = vmatprep.subr.mxu0 0.0
  %1050 = vmatpush1.msra.mxu0 0.0
  %1051 = vmatprep.subr.mxu0 0.0
  %1052 = vmatpush1.msra.mxu0 0.0
  %1053 = vmatprep.subr.mxu0 0.0
  %1054 = vmatpush1.msra.mxu0 0.0
  %1055 = vmatprep.subr.mxu0 0.0
  %1056 = vmatpush1.msra.mxu0 0.0
  %1057 = vmatprep.subr.mxu0 0.0
  %1058 = vmatpush1.msra.mxu0 0.0
  %1059 = vmatprep.subr.mxu0 0.0
  %1060 = vmatpush1.msra.mxu0 0.0
  %1061 = vmatprep.subr.mxu0 0.0
  %1062 = vmatpush1.msra.mxu0 0.0
  %1063 = vmatprep.subr.mxu0 0.0
  %1064 = vmatpush1.msra.mxu0 0.0
  %1065 = vmatprep.subr.mxu0 0.0
  %1066 = vmatpush1.msra.mxu0 0.0
  %1067 = vmatprep.subr.mxu0 0.0
  %1068 = vmatpush1.msra.mxu0 0.0
  %1069 = vmatprep.subr.mxu0 0.0
  %1070 = vmatpush1.msra.mxu0 0.0
  %1071 = vmatprep.subr.mxu0 0.0
  %1072 = vmatpush1.msra.mxu0 0.0
  %1073 = vmatprep.subr.mxu0 0.0
  %1074 = vmatpush1.msra.mxu0 0.0
  %1075 = vmatprep.subr.mxu0 0.0
  %1076 = vmatpush1.msra.mxu0 0.0
  %1077 = vmatprep.subr.mxu0 0.0
  %1078 = vmatpush1.msra.mxu0 0.0
  %1079 = vmatprep.subr.mxu0 0.0
  %1080 = vmatpush1.msra.mxu0 0.0
  %1081 = vmatprep.subr.mxu0 0.0
  %1082 = vmatpush1.msra.mxu0 0.0
  %1083 = vmatprep.subr.mxu0 0.0
  %1084 = vmatpush1.msra.mxu0 0.0
  %1085 = vmatprep.subr.mxu0 0.0
  %1086 = vmatpush1.msra.mxu0 0.0
  %1087 = vmatprep.subr.mxu0 0.0
  %1088 = vmatpush1.msra.mxu0 0.0
  %1089 = vmatprep.subr.mxu0 0.0
  %1090 = vmatpush1.msra.mxu0 0.0
  %1091 = vmatprep.subr.mxu0 0.0
  %1092 = vmatpush1.msra.mxu0 0.0
  %1093 = vmatprep.subr.mxu0 0.0
  %1094 = vmatpush1.msra.mxu0 0.0
  %1095 = vmatprep.subr.mxu0 0.0
  %1096 = vmatpush1.msra.mxu0 0.0
  %1097 = vmatprep.mubr.f32.mxu0 0.0
  %v1098 = vand.u32 %v717, 4294901760
  %v1099 = vsub.f32 %v717, %v1098
  %v1100 = vand.u32 %v1099, 4294901760
  %1101 = vmatmul.mubr.f32.gmra.mrb[0].mxu0 %v1100
  %v1102 = vpop.f32.mrb[0].mxu0
  %v1103 = vadd.f32 %v1007, %v1102
  %v1104 = vpop.f32.mrb[0].mxu0
  %1105 = vmatprep.mubr.f32.mxu0 0.0
  %v1106 = vand.u32 %v720, 4294901760
  %v1107 = vsub.f32 %v720, %v1106
  %v1108 = vand.u32 %v1107, 4294901760
  %1109 = vmatmul.mubr.f32.gmra.mrb[0].mxu0 %v1108
  %v1110 = vpop.f32.mrb[0].mxu0
  %v1111 = vadd.f32 %v1014, %v1110
  %v1112 = vpop.f32.mrb[0].mxu0
  %1113 = vmatprep.mubr.f32.mxu0 0.0
  %v1114 = vand.u32 %v723, 4294901760
  %v1115 = vsub.f32 %v723, %v1114
  %v1116 = vand.u32 %v1115, 4294901760
  %1117 = vmatmul.mubr.f32.gmra.mrb[0].mxu0 %v1116
  %v1118 = vpop.f32.mrb[0].mxu0
  %v1119 = vadd.f32 %v1021, %v1118
  %v1120 = vpop.f32.mrb[0].mxu0
  %1121 = vmatprep.mubr.f32.mxu0 0.0
  %v1122 = vand.u32 %v726, 4294901760
  %v1123 = vsub.f32 %v726, %v1122
  %v1124 = vand.u32 %v1123, 4294901760
  %1125 = vmatmul.mubr.f32.gmra.mrb[0].mxu0 %v1124
  %v1126 = vpop.f32.mrb[0].mxu0
  %v1127 = vadd.f32 %v1028, %v1126
  %v1128 = vpop.f32.mrb[0].mxu0
  %1129 = vdwg.mxu0
  %1130 = vmatprep.subr.mxu0 0.0
  %v1131 = vand.u32 %v683, 4294901760
  %v1132 = vsub.f32 %v683, %v1131
  %v1133 = vand.u32 %v1132, 4294901760
  %1134 = vmatpush1.msra.mxu0 %v1133
  %1135 = vmatprep.subr.mxu0 0.0
  %v1136 = vand.u32 %v684, 4294901760
  %v1137 = vsub.f32 %v684, %v1136
  %v1138 = vand.u32 %v1137, 4294901760
  %1139 = vmatpush1.msra.mxu0 %v1138
  %1140 = vmatprep.subr.mxu0 0.0
  %1141 = vmatpush1.msra.mxu0 0.0
  %1142 = vmatprep.subr.mxu0 0.0
  %1143 = vmatpush1.msra.mxu0 0.0
  %1144 = vmatprep.subr.mxu0 0.0
  %1145 = vmatpush1.msra.mxu0 0.0
  %1146 = vmatprep.subr.mxu0 0.0
  %1147 = vmatpush1.msra.mxu0 0.0
  %1148 = vmatprep.subr.mxu0 0.0
  %1149 = vmatpush1.msra.mxu0 0.0
  %1150 = vmatprep.subr.mxu0 0.0
  %1151 = vmatpush1.msra.mxu0 0.0
  %1152 = vmatprep.subr.mxu0 0.0
  %1153 = vmatpush1.msra.mxu0 0.0
  %1154 = vmatprep.subr.mxu0 0.0
  %1155 = vmatpush1.msra.mxu0 0.0
  %1156 = vmatprep.subr.mxu0 0.0
  %1157 = vmatpush1.msra.mxu0 0.0
  %1158 = vmatprep.subr.mxu0 0.0
  %1159 = vmatpush1.msra.mxu0 0.0
  %1160 = vmatprep.subr.mxu0 0.0
  %1161 = vmatpush1.msra.mxu0 0.0
  %1162 = vmatprep.subr.mxu0 0.0
  %1163 = vmatpush1.msra.mxu0 0.0
  %1164 = vmatprep.subr.mxu0 0.0
  %1165 = vmatpush1.msra.mxu0 0.0
  %1166 = vmatprep.subr.mxu0 0.0
  %1167 = vmatpush1.msra.mxu0 0.0
  %1168 = vmatprep.subr.mxu0 0.0
  %1169 = vmatpush1.msra.mxu0 0.0
  %1170 = vmatprep.subr.mxu0 0.0
  %1171 = vmatpush1.msra.mxu0 0.0
  %1172 = vmatprep.subr.mxu0 0.0
  %1173 = vmatpush1.msra.mxu0 0.0
  %1174 = vmatprep.subr.mxu0 0.0
  %1175 = vmatpush1.msra.mxu0 0.0
  %1176 = vmatprep.subr.mxu0 0.0
  %1177 = vmatpush1.msra.mxu0 0.0
  %1178 = vmatprep.subr.mxu0 0.0
  %1179 = vmatpush1.msra.mxu0 0.0
  %1180 = vmatprep.subr.mxu0 0.0
  %1181 = vmatpush1.msra.mxu0 0.0
  %1182 = vmatprep.subr.mxu0 0.0
  %1183 = vmatpush1.msra.mxu0 0.0
  %1184 = vmatprep.subr.mxu0 0.0
  %1185 = vmatpush1.msra.mxu0 0.0
  %1186 = vmatprep.subr.mxu0 0.0
  %1187 = vmatpush1.msra.mxu0 0.0
  %1188 = vmatprep.subr.mxu0 0.0
  %1189 = vmatpush1.msra.mxu0 0.0
  %1190 = vmatprep.subr.mxu0 0.0
  %1191 = vmatpush1.msra.mxu0 0.0
  %1192 = vmatprep.subr.mxu0 0.0
  %1193 = vmatpush1.msra.mxu0 0.0
  %1194 = vmatprep.subr.mxu0 0.0
  %1195 = vmatpush1.msra.mxu0 0.0
  %1196 = vmatprep.subr.mxu0 0.0
  %1197 = vmatpush1.msra.mxu0 0.0
  %1198 = vmatprep.subr.mxu0 0.0
  %1199 = vmatpush1.msra.mxu0 0.0
  %1200 = vmatprep.mubr.f32.mxu0 0.0
  %v1201 = vand.u32 %v717, 4294901760
  %1202 = vmatmul.mubr.f32.gmra.mrb[0].mxu0 %v1201
  %v1203 = vpop.f32.mrb[0].mxu0
  %v1204 = vadd.f32 %v1103, %v1203
  %v1205 = vpop.f32.mrb[0].mxu0
  %1206 = vmatprep.mubr.f32.mxu0 0.0
  %v1207 = vand.u32 %v720, 4294901760
  %1208 = vmatmul.mubr.f32.gmra.mrb[0].mxu0 %v1207
  %v1209 = vpop.f32.mrb[0].mxu0
  %v1210 = vadd.f32 %v1111, %v1209
  %v1211 = vpop.f32.mrb[0].mxu0
  %1212 = vmatprep.mubr.f32.mxu0 0.0
  %v1213 = vand.u32 %v723, 4294901760
  %1214 = vmatmul.mubr.f32.gmra.mrb[0].mxu0 %v1213
  %v1215 = vpop.f32.mrb[0].mxu0
  %v1216 = vadd.f32 %v1119, %v1215
  %v1217 = vpop.f32.mrb[0].mxu0
  %1218 = vmatprep.mubr.f32.mxu0 0.0
  %v1219 = vand.u32 %v726, 4294901760
  %1220 = vmatmul.mubr.f32.gmra.mrb[0].mxu0 %v1219
  %v1221 = vpop.f32.mrb[0].mxu0
  %v1222 = vadd.f32 %v1127, %v1221
  %v1223 = vpop.f32.mrb[0].mxu0
  %1224 = vdwg.mxu0
  %1225 = vmatprep.subr.mxu0 0.0
  %v1226 = vand.u32 %v683, 4294901760
  %1227 = vmatpush1.msra.mxu0 %v1226
  %1228 = vmatprep.subr.mxu0 0.0
  %v1229 = vand.u32 %v684, 4294901760
  %1230 = vmatpush1.msra.mxu0 %v1229
  %1231 = vmatprep.subr.mxu0 0.0
  %1232 = vmatpush1.msra.mxu0 0.0
  %1233 = vmatprep.subr.mxu0 0.0
  %1234 = vmatpush1.msra.mxu0 0.0
  %1235 = vmatprep.subr.mxu0 0.0
  %1236 = vmatpush1.msra.mxu0 0.0
  %1237 = vmatprep.subr.mxu0 0.0
  %1238 = vmatpush1.msra.mxu0 0.0
  %1239 = vmatprep.subr.mxu0 0.0
  %1240 = vmatpush1.msra.mxu0 0.0
  %1241 = vmatprep.subr.mxu0 0.0
  %1242 = vmatpush1.msra.mxu0 0.0
  %1243 = vmatprep.subr.mxu0 0.0
  %1244 = vmatpush1.msra.mxu0 0.0
  %1245 = vmatprep.subr.mxu0 0.0
  %1246 = vmatpush1.msra.mxu0 0.0
  %1247 = vmatprep.subr.mxu0 0.0
  %1248 = vmatpush1.msra.mxu0 0.0
  %1249 = vmatprep.subr.mxu0 0.0
  %1250 = vmatpush1.msra.mxu0 0.0
  %1251 = vmatprep.subr.mxu0 0.0
  %1252 = vmatpush1.msra.mxu0 0.0
  %1253 = vmatprep.subr.mxu0 0.0
  %1254 = vmatpush1.msra.mxu0 0.0
  %1255 = vmatprep.subr.mxu0 0.0
  %1256 = vmatpush1.msra.mxu0 0.0
  %1257 = vmatprep.subr.mxu0 0.0
  %1258 = vmatpush1.msra.mxu0 0.0
  %1259 = vmatprep.subr.mxu0 0.0
  %1260 = vmatpush1.msra.mxu0 0.0
  %1261 = vmatprep.subr.mxu0 0.0
  %1262 = vmatpush1.msra.mxu0 0.0
  %1263 = vmatprep.subr.mxu0 0.0
  %1264 = vmatpush1.msra.mxu0 0.0
  %1265 = vmatprep.subr.mxu0 0.0
  %1266 = vmatpush1.msra.mxu0 0.0
  %1267 = vmatprep.subr.mxu0 0.0
  %1268 = vmatpush1.msra.mxu0 0.0
  %1269 = vmatprep.subr.mxu0 0.0
  %1270 = vmatpush1.msra.mxu0 0.0
  %1271 = vmatprep.subr.mxu0 0.0
  %1272 = vmatpush1.msra.mxu0 0.0
  %1273 = vmatprep.subr.mxu0 0.0
  %1274 = vmatpush1.msra.mxu0 0.0
  %1275 = vmatprep.subr.mxu0 0.0
  %1276 = vmatpush1.msra.mxu0 0.0
  %1277 = vmatprep.subr.mxu0 0.0
  %1278 = vmatpush1.msra.mxu0 0.0
  %1279 = vmatprep.subr.mxu0 0.0
  %1280 = vmatpush1.msra.mxu0 0.0
  %1281 = vmatprep.subr.mxu0 0.0
  %1282 = vmatpush1.msra.mxu0 0.0
  %1283 = vmatprep.subr.mxu0 0.0
  %1284 = vmatpush1.msra.mxu0 0.0
  %1285 = vmatprep.subr.mxu0 0.0
  %1286 = vmatpush1.msra.mxu0 0.0
  %1287 = vmatprep.subr.mxu0 0.0
  %1288 = vmatpush1.msra.mxu0 0.0
  %1289 = vmatprep.subr.mxu0 0.0
  %1290 = vmatpush1.msra.mxu0 0.0
  %1291 = vmatprep.mubr.f32.mxu0 0.0
  %v1292 = vand.u32 %v717, 4294901760
  %1293 = vmatmul.mubr.f32.gmra.mrb[0].mxu0 %v1292
  %v1294 = vpop.f32.mrb[0].mxu0
  %v1295 = vadd.f32 %v1204, %v1294
  %v1296 = vpop.f32.mrb[0].mxu0
  %1297 = vmatprep.mubr.f32.mxu0 0.0
  %v1298 = vand.u32 %v720, 4294901760
  %1299 = vmatmul.mubr.f32.gmra.mrb[0].mxu0 %v1298
  %v1300 = vpop.f32.mrb[0].mxu0
  %v1301 = vadd.f32 %v1210, %v1300
  %v1302 = vpop.f32.mrb[0].mxu0
  %1303 = vmatprep.mubr.f32.mxu0 0.0
  %v1304 = vand.u32 %v723, 4294901760
  %1305 = vmatmul.mubr.f32.gmra.mrb[0].mxu0 %v1304
  %v1306 = vpop.f32.mrb[0].mxu0
  %v1307 = vadd.f32 %v1216, %v1306
  %v1308 = vpop.f32.mrb[0].mxu0
  %1309 = vmatprep.mubr.f32.mxu0 0.0
  %v1310 = vand.u32 %v726, 4294901760
  %1311 = vmatmul.mubr.f32.gmra.mrb[0].mxu0 %v1310
  %v1312 = vpop.f32.mrb[0].mxu0
  %v1313 = vadd.f32 %v1222, %v1312
  %v1314 = vpop.f32.mrb[0].mxu0
  %1315 = vdwg.mxu0
  %1316 = vst.msk [vmem:[%s6] sm:$0xff] %vm685, %v1295
  %1317 = vst.msk [vmem:[%s6 + $0x8] sm:$0xff] %vm685, %v1301
  %1318 = vst.msk [vmem:[%s6 + $0x10] sm:$0xff] %vm685, %v1307
  %1319 = vst.msk [vmem:[%s6 + $0x18] sm:$0xff] %vm685, %v1313
  // Predicated region
  $region22: #{predecoder_forward.1} parent=0 // pred_check
    _
  $region23: #{predecoder_forward.1} parent=0 // pred_check_branch
    %1321 = sbr.rel (0) target = $region25
  $region24: #{predecoder_forward.1} parent=0 // pred_region
    _
  $region25: #{predecoder_forward.1} parent=0 // pred_fallthru
    _
  // Predicated region
  $region26: #{predecoder_forward.1} parent=0 // pred_check
    _
  $region27: #{predecoder_forward.1} parent=0 // pred_check_branch
    %1323 = sbr.rel (0) target = $region29
  $region28: #{predecoder_forward.1} parent=0 // pred_region
    _
  $region29: #{predecoder_forward.1} parent=0 // pred_fallthru
    _
  // Predicated region
  $region30: #{predecoder_forward.1} parent=0 // pred_check
    _
  $region31: #{predecoder_forward.1} parent=0 // pred_check_branch
    %1325 = sbr.rel (0) target = $region33
  $region32: #{predecoder_forward.1} parent=0 // pred_region
    _
  $region33: #{predecoder_forward.1} parent=0 // pred_fallthru
    _
  // Predicated region
  $region34: #{predecoder_forward.1} parent=0 // pred_check
    _
  $region35: #{predecoder_forward.1} parent=0 // pred_check_branch
    %1327 = sbr.rel (0) target = $region37
  $region36: #{predecoder_forward.1} parent=0 // pred_region
    _
  $region37: #{predecoder_forward.1} parent=0 // pred_fallthru
    _
  // Predicated region
  $region38: #{predecoder_forward.1} parent=0 // pred_check
    _
  $region39: #{predecoder_forward.1} parent=0 // pred_check_branch
    %1329 = sbr.rel (0) target = $region41
  $region40: #{predecoder_forward.1} parent=0 // pred_region
    _
  $region41: #{predecoder_forward.1} parent=0 // pred_fallthru
    _
  // Predicated region
  $region42: #{predecoder_forward.1} parent=0 // pred_check
    _
  $region43: #{predecoder_forward.1} parent=0 // pred_check_branch
    %1331 = sbr.rel (0) target = $region45
  $region44: #{predecoder_forward.1} parent=0 // pred_region
    _
  $region45: #{predecoder_forward.1} parent=0 // pred_fallthru
    _

</llo_original>
